<compile_context>
chip_gen: v7x
topology: tpu7x:2x2x1
jax: 0.10.0
libtpu: 0.0.40
codegen_flags: <defaults>
</compile_context>

<pallas_src>
import jax
import jax.numpy as jnp
from jax.experimental import pallas as pl
from jax.experimental.pallas import tpu as pltpu

SUB, LANE = 8, 128          # one f32 vreg tile (sublane x lane)
B, IN, OUT = 2, 2, 2        # nn.Linear(2, 2) on a (2, 2) input

# Row layout inside the single (8, 128) input slab.
ROW_X = 0                   # rows 0..1 : activations x        (lanes 0..IN-1)
ROW_W = 2                   # rows 2..3 : W^T (pre-transposed) (lanes 0..OUT-1)
ROW_B = 4                   # row  4    : bias                 (lanes 0..OUT-1)
                            # rows 5..7 : zero padding


def linear_kernel(slab_ref, o_ref):
    # slab_ref : (8, 128) f32 — x, W^T and bias fused into one vreg tile.
    # o_ref    : (8, 128) f32 — rows 0..1 / lanes 0..1 carry y; rest zero.
    s = slab_ref[...]

    x = s[ROW_X:ROW_X + B, :]               # (2, 128); lanes >= IN are zero
    w0 = s[ROW_W + 0:ROW_W + 1, :]          # (1, 128)  row 0 of W^T
    w1 = s[ROW_W + 1:ROW_W + 2, :]          # (1, 128)  row 1 of W^T
    b = s[ROW_B:ROW_B + 1, :]               # (1, 128)  bias

    # VPU path: two independent partial products (can co-issue across VALU
    # slots), summed with the bias once.  Zero-padded lanes stay zero.
    p0 = x[:, 0:1] * w0                     # (2, 128)
    p1 = x[:, 1:2] * w1                     # (2, 128)
    acc = b + p0 + p1                       # (2, 128)

    # Single full-tile, lane/sublane-dense store (unmasked vst).
    o_ref[...] = jnp.concatenate(
        [acc, jnp.zeros((SUB - B, LANE), acc.dtype)], axis=0)


def linear_pallas(slab):
    return pl.pallas_call(
        linear_kernel,
        out_shape=jax.ShapeDtypeStruct((SUB, LANE), jnp.float32),
        # Tiny shapes: full-array blocks, single grid point, explicit VMEM.
        in_specs=[pl.BlockSpec(memory_space=pltpu.MemorySpace.VMEM)],
        out_specs=pl.BlockSpec(memory_space=pltpu.MemorySpace.VMEM),
    )(slab)


def prepare_params(weight, bias):
    """One-time layout: pre-transposed weight + bias inside a (8,128) slab.

    weight: (OUT, IN) PyTorch convention; bias: (OUT,).
    """
    slab = jnp.zeros((SUB, LANE), jnp.float32)
    slab = slab.at[ROW_W:ROW_W + IN, :OUT].set(weight.T.astype(jnp.float32))
    slab = slab.at[ROW_B, :OUT].set(bias.astype(jnp.float32))
    return slab


@jax.jit
def model_forward(x, param_slab):
    # Fuse the per-call activations into the (otherwise constant) parameter
    # slab -> a single input DMA descriptor for the kernel.
    slab = param_slab.at[ROW_X:ROW_X + B, :IN].set(x.astype(jnp.float32))
    tile = linear_pallas(slab)              # (8, 128) lane-dense output
    # torch.stack((y,y,y,y), 0)[-3] == y ; flatten(start_dim=-1) on a 2-D
    # tensor is the identity -> slicing y back out is the full forward.
    return tile[:B, :OUT]


if __name__ == "__main__":
    key = jax.random.PRNGKey(0)
    kx, kw, kb = jax.random.split(key, 3)

    # Deterministic inputs / parameters (nn.Linear(2, 2) shapes).
    x = jax.random.normal(kx, (B, IN), dtype=jnp.float32)
    # Mimic PyTorch's default uniform(-1/sqrt(in), 1/sqrt(in)) init.
    bound = 1.0 / jnp.sqrt(float(IN))
    weight = jax.random.uniform(kw, (OUT, IN), jnp.float32, -bound, bound)
    bias = jax.random.uniform(kb, (OUT,), jnp.float32, -bound, bound)

    param_slab = prepare_params(weight, bias)
    out = model_forward(x, param_slab)
    out = jax.block_until_ready(out)

    # Reference: plain JAX version of the full torch forward (incl. the
    # stack / [-3] / flatten chain).
    y_ref = x @ weight.T + bias
    ref = jnp.stack((y_ref, y_ref, y_ref, y_ref), axis=0)[-3].reshape(B, -1)
    assert out.shape == (B, OUT)
    assert jnp.allclose(out, ref, atol=1e-5, rtol=1e-5)

    print("KERNEL_OK")
</pallas_src>

<mosaic_0001>
module attributes {stable_mosaic.version = 11 : i64} {
  func.func @linear_kernel(%arg0: memref<8x128xf32, #tpu.memory_space<vmem>>, %arg1: memref<8x128xf32, #tpu.memory_space<vmem>>) attributes {dimension_semantics = [], scalar_prefetch = 0 : i64, scratch_operands = 0 : i64, tpu.core_type = #tpu.core_type<tc>} {
    %c0 = arith.constant 0 : index
    %c0_0 = arith.constant 0 : index
    %0 = vector.load %arg0[%c0, %c0_0] : memref<8x128xf32, #tpu.memory_space<vmem>>, vector<8x128xf32>
    %1 = vector.extract_strided_slice %0 {offsets = [0, 0], sizes = [2, 128], strides = [1, 1]} : vector<8x128xf32> to vector<2x128xf32>
    %2 = vector.extract_strided_slice %0 {offsets = [2, 0], sizes = [1, 128], strides = [1, 1]} : vector<8x128xf32> to vector<1x128xf32>
    %3 = vector.extract_strided_slice %0 {offsets = [3, 0], sizes = [1, 128], strides = [1, 1]} : vector<8x128xf32> to vector<1x128xf32>
    %4 = vector.extract_strided_slice %0 {offsets = [4, 0], sizes = [1, 128], strides = [1, 1]} : vector<8x128xf32> to vector<1x128xf32>
    %5 = vector.extract_strided_slice %1 {offsets = [0, 0], sizes = [2, 1], strides = [1, 1]} : vector<2x128xf32> to vector<2x1xf32>
    %6 = vector.broadcast %5 : vector<2x1xf32> to vector<2x128xf32>
    %7 = vector.broadcast %2 : vector<1x128xf32> to vector<2x128xf32>
    %8 = arith.mulf %6, %7 : vector<2x128xf32>
    %9 = vector.extract_strided_slice %1 {offsets = [0, 1], sizes = [2, 1], strides = [1, 1]} : vector<2x128xf32> to vector<2x1xf32>
    %10 = vector.broadcast %9 : vector<2x1xf32> to vector<2x128xf32>
    %11 = vector.broadcast %3 : vector<1x128xf32> to vector<2x128xf32>
    %12 = arith.mulf %10, %11 : vector<2x128xf32>
    %13 = vector.broadcast %4 : vector<1x128xf32> to vector<2x128xf32>
    %14 = arith.addf %13, %8 : vector<2x128xf32>
    %15 = arith.addf %14, %12 : vector<2x128xf32>
    %cst = arith.constant 0.000000e+00 : f32
    %16 = vector.broadcast %cst : f32 to vector<6x128xf32>
    %17 = tpu.concatenate %15, %16 in 0 : vector<2x128xf32>, vector<6x128xf32> -> vector<8x128xf32>
    %c0_1 = arith.constant 0 : index
    %c0_2 = arith.constant 0 : index
    %18 = vector.load %arg1[%c0_1, %c0_2] : memref<8x128xf32, #tpu.memory_space<vmem>>, vector<8x128xf32>
    tpu.vector_store %arg1[%c0_1, %c0_2], %17 {strides = array<i32>} : memref<8x128xf32, #tpu.memory_space<vmem>>, vector<8x128xf32>,
    return
  }
}

</mosaic_0001>

<llo_original>
// kernel: model_forward.1
$region0: #{model_forward.1}
  #allocation0 [shape = 'u32[]', space=smem, size = 0x4, offset = 0x4, fixed_abs, tag = 'smem constant byte address 0x4 - core index']
  #allocation1 [shape = 'u32[144,128]{1,0:T(1,128)}', space=vmem, size = 0x12000, scoped, tag = 'internal scratch']
  %s0 = inlined_call_operand.vmem [shape: f32[8,128], index: 0, kind: input, shape index: {}]
  %s1 = inlined_call_operand.vmem [shape: f32[8,128], index: 1, kind: output, shape index: {}]
  %s2 = sld [smem:[#allocation0]]
  $region14: #{model_forward.1} parent=0
    _
  %s4 = ssub.s32 1, %s2
  %s5 = scalar_select 0, %s4, %s2
  // Predicated region
  $region2: #{model_forward.1} parent=0 // pred_check
    _
  $region3: #{model_forward.1} parent=0 // pred_check_branch
    %7 = sbr.rel (0) target = $region5
  $region4: #{model_forward.1} parent=0 // pred_region
    _
  $region5: #{model_forward.1} parent=0 // pred_fallthru
    _
  %v8 = vld [vmem:[%s0] sm:$0xff]
  %10 = vset.pattern.permute.xlu0 0
  %11 = vperm.xlu0 %10, %v8
  %v12 = vpop.permute.xlu0 %11
  %v14 = vlaneseq
  %v15 = vshrl.u32 %v14, 7
  %v16 = vsub.s32 2, %v15
  %v17 = vrot.slane %v8, %v16
  %v18 = vmul.f32 %v12, %v17
  %19 = vset.pattern.permute.xlu0 1
  %20 = vperm.xlu0 %19, %v8
  %v21 = vpop.permute.xlu0 %20
  %v23 = vlaneseq
  %v24 = vshrl.u32 %v23, 7
  %v25 = vsub.s32 3, %v24
  %v26 = vrot.slane %v8, %v25
  %v27 = vmul.f32 %v21, %v26
  %v28 = vlaneseq
  %v29 = vshrl.u32 %v28, 7
  %v30 = vsub.s32 4, %v29
  %v31 = vrot.slane %v8, %v30
  %v32 = vadd.f32 %v31, %v18
  %v33 = vadd.f32 %v32, %v27
  %vm34 = vcmask 1041408
  %v35 = vsel %vm34, %v33, 0.0
  %36 = vst [vmem:[%s1] sm:$0xff] %v35
  // Predicated region
  $region6: #{model_forward.1} parent=0 // pred_check
    _
  $region7: #{model_forward.1} parent=0 // pred_check_branch
    %38 = sbr.rel (0) target = $region9
  $region8: #{model_forward.1} parent=0 // pred_region
    _
  $region9: #{model_forward.1} parent=0 // pred_fallthru
    _
  // Predicated region
  $region10: #{model_forward.1} parent=0 // pred_check
    _
  $region11: #{model_forward.1} parent=0 // pred_check_branch
    %40 = sbr.rel (0) target = $region13
  $region12: #{model_forward.1} parent=0 // pred_region
    _
  $region13: #{model_forward.1} parent=0 // pred_fallthru
    _

</llo_original>
